<compile_context>
chip_gen: v5e
topology: v5e:2x2
jax: 0.10.0
libtpu: 0.0.40
codegen_flags: <defaults>
</compile_context>

<pallas_src>
import jax
import jax.numpy as jnp
import numpy as np
from jax.experimental import pallas as pl
from jax.experimental.pallas import tpu as pltpu


def _vanilla_attn_kernel(x_ref, w1_ref, b1_ref, w2_ref, h_out_ref, wgt_out_ref):
    """One grid step processes a tile of TB batch elements.

    x_ref:       (TB, S, H)  input tile (f32 or bf16 storage dtype)
    w1_ref:      (H, A)      first linear weight, stored (in, out)
    b1_ref:      (1, A)      first linear bias (row), f32
    w2_ref:      (1, A)      second linear weight (row), f32 -- b2 dropped
    h_out_ref:   (TB, H)     hidden_states output tile, f32
    wgt_out_ref: (TB, S)     attention-weights output tile, f32
    """
    TB, S, H = x_ref.shape
    A = w1_ref.shape[1]

    x = x_ref[...]                                        # (TB, S, H)

    # ---- projection: Linear(H, A) -> ReLU -> Linear(A, 1) -------------------
    # Flatten the batch tile so the MXU sees one dense (TB*S, H) x (H, A)
    # matmul.  S is a multiple of 8 (or TB == full B) in supported configs, so
    # this reshape is a layout-preserving view rather than a relayout copy.
    h1 = jnp.dot(x.reshape(TB * S, H), w1_ref[...],
                 preferred_element_type=jnp.float32)
    h1 = jnp.maximum(h1 + b1_ref[...], 0.0)               # (TB*S, A) f32

    # Output-width-1 second Linear: VPU multiply + lane reduce (no N=1 matmul).
    # The scalar bias b2 is omitted on purpose: softmax(energy + c) == softmax(energy)
    # and energy itself is never returned.
    energy = jnp.sum(h1.reshape(TB, S, A) * w2_ref[...], axis=-1)   # (TB, S)

    # ---- softmax over the sequence axis (batch on sublanes, seq on lanes) ---
    m = jnp.max(energy, axis=-1, keepdims=True)           # (TB, 1)
    p = jnp.exp(energy - m)                                # (TB, S) unnormalized
    denom = jnp.sum(p, axis=-1, keepdims=True)             # (TB, 1)
    inv = pl.reciprocal(denom, approx=True)                # (TB, 1)  EUP slot

    # ---- attention-weighted sum over the sequence axis ----------------------
    # Use the unnormalized p for the big (TB,S,H) multiply and fold 1/denom
    # into the small (TB, H) result; only wgt_out needs the normalized weights.
    x_f32 = x.astype(jnp.float32)                          # no-op for f32 input
    h_unnorm = jnp.sum(x_f32 * p[:, :, None], axis=1)      # (TB, H)
    h_out_ref[...] = (h_unnorm * inv).astype(h_out_ref.dtype)
    wgt_out_ref[...] = (p * inv).astype(wgt_out_ref.dtype)


def _vmem_capacity_bytes():
    """Per-TensorCore VMEM capacity; conservative fallback if the query fails."""
    try:
        cap = getattr(pltpu.get_tpu_info(), "vmem_capacity_bytes", None)
        if cap:
            return int(cap)
    except Exception:
        pass
    return 64 * 1024 * 1024   # v7x per-TC VMEM -- safe lower bound for all gens


def _pick_block_b(B, S, H, A, vmem_budget_bytes):
    """Largest batch tile whose per-step working set fits the VMEM budget.

    Per batch-row bytes (counted at 4B/elem, conservative even for bf16 x):
      3*S*H    : double-buffered x input block (2x) + (TB,S,H) weighted-sum temp
      2*S*A    : h1 matmul output + ReLU copy
      2*(H+S)  : double-buffered (TB,H) / (TB,S) output blocks
      6*S      : energy / p / weights row temporaries
    Fixed: 2*H*A (double-buffered w1) + biases + compiler slack.
    """
    per_row = 4 * (3 * S * H + 2 * S * A + 2 * (H + S) + 6 * S)
    fixed = 4 * (2 * H * A + 4 * A) + (2 << 20)
    tb = (vmem_budget_bytes - fixed) // per_row
    if tb < 8:
        # TODO(synk): add a sequence-tiled online-softmax path (grid over S with
        # an 'arbitrary' axis and m/l/acc scratch) for very long S on
        # small-VMEM chips; until then fall back to the minimal 8-row tile.
        return min(B, 8)
    if tb >= B:
        if B <= 8:
            return B
        # Force >= 2 grid steps so both v7x TensorCores get work; at most one
        # extra ~0.35us step on single-TC v5e/v6e.
        half = -(-B // 2)
        return min(B, -(-half // 8) * 8)
    return max(8, (tb // 8) * 8)


def vanilla_attention(x, w1, b1, w2, b2=None, *, block_b=None, stream_dtype=None):
    """x: (B, S, H). Returns (hidden_states (B, H) f32, weights (B, S) f32).

    b2 is accepted for interface parity with the PyTorch module but never
    enters the kernel: a scalar bias on the energies cancels in the softmax.
    stream_dtype (e.g. jnp.bfloat16) optionally halves HBM traffic for x/w1;
    the kernel is HBM-bound, so this is a near-2x wall-clock lever.
    """
    del b2
    B, S, H = x.shape
    A = w1.shape[1]

    if stream_dtype is not None:
        x = x.astype(stream_dtype)
        w1 = w1.astype(stream_dtype)

    vmem_cap = _vmem_capacity_bytes()
    vmem_limit = min(vmem_cap * 3 // 4, 100 * 1024 * 1024)

    if block_b is None:
        block_b = _pick_block_b(B, S, H, A, vmem_limit - (4 << 20))
    TB = block_b
    grid_b = pl.cdiv(B, TB)
    # Note: when B % TB != 0 the trailing partial block computes softmax on
    # garbage rows; rows are independent and the masked output write discards
    # them, so results stay correct.

    b1_row = b1.reshape(1, A).astype(jnp.float32)
    w2_row = w2.reshape(1, A).astype(jnp.float32)

    cost = pl.CostEstimate(
        flops=int(2 * B * S * H * A + 2 * B * S * A + 2 * B * S * H),
        transcendentals=int(B * S),
        bytes_accessed=int(x.size * x.dtype.itemsize
                           + w1.size * w1.dtype.itemsize
                           + 4 * (B * H + B * S + 2 * A)),
    )

    h_out, wgt_out = pl.pallas_call(
        _vanilla_attn_kernel,
        out_shape=(
            jax.ShapeDtypeStruct((B, H), jnp.float32),
            jax.ShapeDtypeStruct((B, S), jnp.float32),
        ),
        grid_spec=pltpu.PrefetchScalarGridSpec(
            num_scalar_prefetch=0,
            grid=(grid_b,),
            in_specs=[
                pl.BlockSpec((TB, S, H), lambda b: (b, 0, 0)),
                # Grid-invariant operands: tiny; their double-buffering cost is
                # already folded into the TB budget above.
                pl.BlockSpec((H, A), lambda b: (0, 0)),
                pl.BlockSpec((1, A), lambda b: (0, 0)),
                pl.BlockSpec((1, A), lambda b: (0, 0)),
            ],
            out_specs=[
                pl.BlockSpec((TB, H), lambda b: (b, 0)),
                pl.BlockSpec((TB, S), lambda b: (b, 0)),
            ],
        ),
        compiler_params=pltpu.CompilerParams(
            dimension_semantics=("parallel",),
            vmem_limit_bytes=int(vmem_limit),
        ),
        cost_estimate=cost,
    )(x, w1, b1_row, w2_row)

    return h_out, wgt_out


def _reference(x, w1, b1, w2, b2):
    """Pure-JAX reference identical to the PyTorch forward (including b2)."""
    h1 = jnp.maximum(jnp.einsum("bsh,ha->bsa", x, w1) + b1, 0.0)
    energy = jnp.einsum("bsa,a->bs", h1, w2) + b2          # squeeze(-1)
    weights = jax.nn.softmax(energy, axis=-1)
    hidden = jnp.sum(x * weights[..., None], axis=-2)
    return hidden, weights


if __name__ == "__main__":
    B, S, H, A = 2, 8, 32, 16

    key = jax.random.PRNGKey(0)
    kx, kw1, kb1, kw2, kb2 = jax.random.split(key, 5)

    x = jax.random.normal(kx, (B, S, H), dtype=jnp.float32)

    # Deterministic PyTorch-Linear-style init: U(-1/sqrt(fan_in), 1/sqrt(fan_in)).
    lim1 = 1.0 / np.sqrt(H)
    w1 = jax.random.uniform(kw1, (H, A), minval=-lim1, maxval=lim1,
                            dtype=jnp.float32)       # stored as (in, out)
    b1 = jax.random.uniform(kb1, (A,), minval=-lim1, maxval=lim1,
                            dtype=jnp.float32)
    lim2 = 1.0 / np.sqrt(A)
    w2 = jax.random.uniform(kw2, (A,), minval=-lim2, maxval=lim2,
                            dtype=jnp.float32)       # Linear(A, 1) weight
    b2 = jax.random.uniform(kb2, (1,), minval=-lim2, maxval=lim2,
                            dtype=jnp.float32)

    hidden, weights = vanilla_attention(x, w1, b1, w2, b2)
    hidden = jax.block_until_ready(hidden)
    weights = jax.block_until_ready(weights)

    ref_hidden, ref_weights = _reference(x, w1, b1, w2, b2)
    # Tolerance relaxed vs exact f32 only because of the EUP approximate
    # reciprocal in the softmax normalization (use approx=False for bit-tight).
    np.testing.assert_allclose(np.asarray(hidden), np.asarray(ref_hidden),
                               rtol=2e-3, atol=2e-3)
    np.testing.assert_allclose(np.asarray(weights), np.asarray(ref_weights),
                               rtol=2e-3, atol=2e-3)

    print("KERNEL_OK")
</pallas_src>

<mosaic_0001>
module attributes {stable_mosaic.version = 11 : i64} {
  func.func @_vanilla_attn_kernel(%arg0: i32, %arg1: memref<2x8x32xf32, #tpu.memory_space<vmem>>, %arg2: memref<32x16xf32, #tpu.memory_space<vmem>>, %arg3: memref<1x16xf32, #tpu.memory_space<vmem>>, %arg4: memref<1x16xf32, #tpu.memory_space<vmem>>, %arg5: memref<2x32xf32, #tpu.memory_space<vmem>>, %arg6: memref<2x8xf32, #tpu.memory_space<vmem>>) attributes {dimension_semantics = [#tpu.dimension_semantics<parallel>], iteration_bounds = array<i64: 1>, scalar_prefetch = 0 : i64, scratch_operands = 0 : i64, tpu.core_type = #tpu.core_type<tc>, window_params = [{transform_indices = @transform_0, window_bounds = array<i64: 2, 8, 32>}, {pipeline_mode = #tpu.pipeline_mode<synchronous>, transform_indices = @transform_1, window_bounds = array<i64: 32, 16>}, {pipeline_mode = #tpu.pipeline_mode<synchronous>, transform_indices = @transform_2, window_bounds = array<i64: 1, 16>}, {pipeline_mode = #tpu.pipeline_mode<synchronous>, transform_indices = @transform_3, window_bounds = array<i64: 1, 16>}, {transform_indices = @transform_4, window_bounds = array<i64: 2, 32>}, {transform_indices = @transform_5, window_bounds = array<i64: 2, 8>}]} {
    %c0 = arith.constant 0 : index
    %c0_0 = arith.constant 0 : index
    %c0_1 = arith.constant 0 : index
    %0 = vector.load %arg1[%c0, %c0_0, %c0_1] : memref<2x8x32xf32, #tpu.memory_space<vmem>>, vector<2x8x32xf32>
    %1 = vector.shape_cast %0 : vector<2x8x32xf32> to vector<16x32xf32>
    %c0_2 = arith.constant 0 : index
    %c0_3 = arith.constant 0 : index
    %2 = vector.load %arg2[%c0_2, %c0_3] : memref<32x16xf32, #tpu.memory_space<vmem>>, vector<32x16xf32>
    %cst = arith.constant dense<0.000000e+00> : vector<16x16xf32>
    %3 = tpu.matmul %1, %2, %cst {dimension_numbers = #tpu.dot_dimension_numbers<[1], [0], [0], [1], [0, 0, 1, 1], [], []>} : vector<16x32xf32>, vector<32x16xf32>, vector<16x16xf32> -> vector<16x16xf32>
    %c0_4 = arith.constant 0 : index
    %c0_5 = arith.constant 0 : index
    %4 = vector.load %arg3[%c0_4, %c0_5] : memref<1x16xf32, #tpu.memory_space<vmem>>, vector<1x16xf32>
    %5 = vector.broadcast %4 : vector<1x16xf32> to vector<16x16xf32>
    %6 = arith.addf %3, %5 : vector<16x16xf32>
    %cst_6 = arith.constant 0.000000e+00 : f32
    %7 = vector.broadcast %cst_6 : f32 to vector<16x16xf32>
    %8 = arith.maximumf %6, %7 : vector<16x16xf32>
    %9 = vector.shape_cast %8 : vector<16x16xf32> to vector<2x8x16xf32>
    %c0_7 = arith.constant 0 : index
    %c0_8 = arith.constant 0 : index
    %10 = vector.load %arg4[%c0_7, %c0_8] : memref<1x16xf32, #tpu.memory_space<vmem>>, vector<1x16xf32>
    %11 = vector.shape_cast %10 : vector<1x16xf32> to vector<1x1x16xf32>
    %12 = vector.broadcast %11 : vector<1x1x16xf32> to vector<2x8x16xf32>
    %13 = arith.mulf %9, %12 : vector<2x8x16xf32>
    %cst_9 = arith.constant dense<0.000000e+00> : vector<2x8xf32>
    %14 = vector.multi_reduction <add>, %13, %cst_9 [2] : vector<2x8x16xf32> to vector<2x8xf32>
    %cst_10 = arith.constant dense<0xFF800000> : vector<2xf32>
    %15 = vector.multi_reduction <maximumf>, %14, %cst_10 [1] : vector<2x8xf32> to vector<2xf32>
    %16 = vector.shape_cast %15 : vector<2xf32> to vector<2x1xf32>
    %17 = vector.broadcast %16 : vector<2x1xf32> to vector<2x8xf32>
    %18 = arith.subf %14, %17 : vector<2x8xf32>
    %19 = math.exp %18 : vector<2x8xf32>
    %cst_11 = arith.constant dense<0.000000e+00> : vector<2xf32>
    %20 = vector.multi_reduction <add>, %19, %cst_11 [1] : vector<2x8xf32> to vector<2xf32>
    %21 = vector.shape_cast %20 : vector<2xf32> to vector<2x1xf32>
    %22 = tpu.reciprocal %21 {approx = true} : vector<2x1xf32> -> vector<2x1xf32>
    %23 = vector.shape_cast %19 : vector<2x8xf32> to vector<2x8x1xf32>
    %24 = vector.broadcast %23 : vector<2x8x1xf32> to vector<2x8x32xf32>
    %25 = arith.mulf %0, %24 : vector<2x8x32xf32>
    %cst_12 = arith.constant dense<0.000000e+00> : vector<2x32xf32>
    %26 = vector.multi_reduction <add>, %25, %cst_12 [1] : vector<2x8x32xf32> to vector<2x32xf32>
    %27 = vector.broadcast %22 : vector<2x1xf32> to vector<2x32xf32>
    %28 = arith.mulf %26, %27 : vector<2x32xf32>
    %c0_13 = arith.constant 0 : index
    %c0_14 = arith.constant 0 : index
    %29 = vector.load %arg5[%c0_13, %c0_14] : memref<2x32xf32, #tpu.memory_space<vmem>>, vector<2x32xf32>
    tpu.vector_store %arg5[%c0_13, %c0_14], %28 {strides = array<i32>} : memref<2x32xf32, #tpu.memory_space<vmem>>, vector<2x32xf32>,
    %30 = vector.broadcast %22 : vector<2x1xf32> to vector<2x8xf32>
    %31 = arith.mulf %19, %30 : vector<2x8xf32>
    %c0_15 = arith.constant 0 : index
    %c0_16 = arith.constant 0 : index
    %32 = vector.load %arg6[%c0_15, %c0_16] : memref<2x8xf32, #tpu.memory_space<vmem>>, vector<2x8xf32>
    tpu.vector_store %arg6[%c0_15, %c0_16], %31 {strides = array<i32>} : memref<2x8xf32, #tpu.memory_space<vmem>>, vector<2x8xf32>,
    return
  }
  func.func @transform_0(%arg0: i32) -> (i32, i32, i32) {
    %c0_i32 = arith.constant 0 : i32
    %c0_i32_0 = arith.constant 0 : i32
    %c0_i32_1 = arith.constant 0 : i32
    return %arg0, %c0_i32, %c0_i32_0 : i32, i32, i32
  }
  func.func @transform_1(%arg0: i32) -> (i32, i32) {
    %c0_i32 = arith.constant 0 : i32
    %c0_i32_0 = arith.constant 0 : i32
    %c0_i32_1 = arith.constant 0 : i32
    return %c0_i32, %c0_i32_0 : i32, i32
  }
  func.func @transform_2(%arg0: i32) -> (i32, i32) {
    %c0_i32 = arith.constant 0 : i32
    %c0_i32_0 = arith.constant 0 : i32
    %c0_i32_1 = arith.constant 0 : i32
    return %c0_i32, %c0_i32_0 : i32, i32
  }
  func.func @transform_3(%arg0: i32) -> (i32, i32) {
    %c0_i32 = arith.constant 0 : i32
    %c0_i32_0 = arith.constant 0 : i32
    %c0_i32_1 = arith.constant 0 : i32
    return %c0_i32, %c0_i32_0 : i32, i32
  }
  func.func @transform_4(%arg0: i32) -> (i32, i32) {
    %c0_i32 = arith.constant 0 : i32
    %c0_i32_0 = arith.constant 0 : i32
    return %arg0, %c0_i32 : i32, i32
  }
  func.func @transform_5(%arg0: i32) -> (i32, i32) {
    %c0_i32 = arith.constant 0 : i32
    %c0_i32_0 = arith.constant 0 : i32
    return %arg0, %c0_i32 : i32, i32
  }
}

</mosaic_0001>

<llo_original>
// kernel: tpu_custom_call.1
$region0: #{tpu_custom_call.1}
  #allocation0 [shape = 'u32[]', space=smem, size = 0x4, offset = 0x4, fixed_abs, tag = 'smem constant byte address 0x4 - core index']
  #allocation1 [shape = 'u32[72,128]{1,0:T(1,128)}', space=vmem, size = 0x9000, scoped, tag = 'internal scratch']
  %s0 = inlined_call_operand.vmem [shape: f32[2,8,32], index: 0, kind: input, shape index: {}]
  %s1 = inlined_call_operand.vmem [shape: f32[32,16], index: 1, kind: input, shape index: {}]
  %s2 = inlined_call_operand.vmem [shape: f32[1,16], index: 2, kind: input, shape index: {}]
  %s3 = inlined_call_operand.vmem [shape: f32[1,16], index: 3, kind: input, shape index: {}]
  %s4 = inlined_call_operand.hbm [shape: f32[2,32], index: 4, kind: output, shape index: {0}]
  %s5 = inlined_call_operand.hbm [shape: f32[2,8], index: 5, kind: output, shape index: {1}]
  %6 = xla_tuple %s4, %s5
  %s7 = sld [smem:[#allocation0]]
  $region34: #{tpu_custom_call.1} parent=0
    _
  %s9 = ssub.s32 1, %s7
  %s10 = scalar_select 0, %s9, %s7
  $region1: #{tpu_custom_call.1} parent=0
    #allocation2 [shape = 'u8[1024]{0}', space=vmem, size = 0x400, scoped, tag = 'output window, operand 0, single buffered']
    #allocation3 [shape = 's32[1]{0}', space=sflag, size = 0x4, scoped, tag = 'scoped memory for tpu_custom_call.1']
    #allocation4 [shape = 'u8[1024]{0}', space=vmem, size = 0x400, scoped, tag = 'output window, operand 1, single buffered']
    #allocation5 [shape = 's32[1]{0}', space=sflag, size = 0x4, scoped, tag = 'scoped memory for tpu_custom_call.1']
    %11 = vsyncpa [#allocation3], 0
    %12 = vsyncpa [#allocation5], 0
    // Predicated region
    $region2: #{tpu_custom_call.1} parent=1 // pred_check
      _
    $region3: #{tpu_custom_call.1} parent=1 // pred_check_branch
      %14 = sbr.rel (0) target = $region5
    $region4: #{tpu_custom_call.1} parent=1 // pred_region
      _
    $region5: #{tpu_custom_call.1} parent=1 // pred_fallthru
      _
    // Predicated region
    $region6: #{tpu_custom_call.1} parent=1 // pred_check
      _
    $region7: #{tpu_custom_call.1} parent=1 // pred_check_branch
      %16 = sbr.rel (0) target = $region9
    $region8: #{tpu_custom_call.1} parent=1 // pred_region
      _
    $region9: #{tpu_custom_call.1} parent=1 // pred_fallthru
      _
    // Predicated region
    $region10: #{tpu_custom_call.1} parent=1 // pred_check
      _
    $region11: #{tpu_custom_call.1} parent=1 // pred_check_branch
      %18 = sbr.rel (0) target = $region13
    $region12: #{tpu_custom_call.1} parent=1 // pred_region
      _
    $region13: #{tpu_custom_call.1} parent=1 // pred_fallthru
      _
    // Predicated region
    $region14: #{tpu_custom_call.1} parent=1 // pred_check
      _
    $region15: #{tpu_custom_call.1} parent=1 // pred_check_branch
      %20 = sbr.rel (0) target = $region17
    $region16: #{tpu_custom_call.1} parent=1 // pred_region
      _
    $region17: #{tpu_custom_call.1} parent=1 // pred_fallthru
      _
    %v21 = vld [vmem:[%s0] sm:$0xff]
    %v22 = vld [vmem:[%s0 + $0x8] sm:$0xff]
    %v23 = vld [vmem:[%s1] sm:$0xff]
    %v24 = vld [vmem:[%s1 + $0x8] sm:$0xff]
    %v25 = vld [vmem:[%s1 + $0x10] sm:$0xff]
    %v26 = vld [vmem:[%s1 + $0x18] sm:$0xff]
    %v27 = vld [vmem:[%s2] sm:$0x1]
    %v29 = vperm.slane %v27, 0
    %vm31 = vcmask 261120
    %v33 = vsel %vm31, %v21, 0
    %v36 = vsel %vm31, %v22, 0
    %38 = vmatpush.msra.mxu0 0.0
    %39 = vmatpush.msra.mxu0 0.0
    %40 = vmatpush.msra.mxu0 0.0
    %41 = vmatpush.msra.mxu0 0.0
    %42 = vmatpush.msra.mxu0 0.0
    %43 = vmatpush.msra.mxu0 0.0
    %44 = vmatpush.msra.mxu0 0.0
    %45 = vmatpush.msra.mxu0 0.0
    %46 = vmatpush.msra.mxu0 0.0
    %47 = vmatpush.msra.mxu0 0.0
    %48 = vmatpush.msra.mxu0 0.0
    %49 = vmatpush.msra.mxu0 0.0
    %50 = vmatpush.msra.mxu0 %v26
    %51 = vmatpush.msra.mxu0 %v25
    %52 = vmatpush.msra.mxu0 %v24
    %53 = vmatpush.msra.mxu0 %v23
    %54 = vmatmul.f32.gmra.mxu0 %v33
    %v55 = vpop.f32.mrf.mxu0
    %v56 = vadd.f32 %v29, %v55
    %57 = vmatmul.f32.gmra.mxu0 %v36
    %v58 = vpop.f32.mrf.mxu0
    %v59 = vadd.f32 %v29, %v58
    %60 = vdwg.mxu0
    %v61 = vmax.f32 %v56, 0.0
    %v62 = vmax.f32 %v59, 0.0
    %v63 = vld [vmem:[%s3] sm:$0x1]
    %v65 = vperm.slane %v63, 0
    %v67 = vmul.f32 %v61, %v65
    %v68 = vmul.f32 %v62, %v65
    %vm69 = vcmask 130048
    %v70 = vsel %vm69, %v67, 0.0
    %71 = vadd.xlane.f32.xlu0 %v70
    %v72 = vpop.xlane.xlu0 %71
    %v73 = vsel %vm69, %v68, 0.0
    %74 = vadd.xlane.f32.xlu0 %v73
    %v75 = vpop.xlane.xlu0 %74
    %v78 = vlaneseq
    %v79 = vand.u32 %v78, 127
    %v80 = vperm.slane %v72, %v79
    %v81 = vperm.slane %v75, %v79
    %vm82 = vcmask 1041409
    %v83 = vsel %vm82, %v81, %v80
    %vm85 = vcmask 58368
    %v86 = vsel %vm85, %v83, -inf
    %87 = vmax.xlane.f32.xlu0 %v86
    %v88 = vpop.xlane.xlu0 %87
    %v90 = vperm.slane %v88, 0
    %v91 = vperm.slane %v88, 1
    %v94 = vsub.f32 %v72, %v90
    %v95 = vsub.f32 %v75, %v91
    %v96 = vmul.f32 %v94, 1.442695
    %v97 = vpow.pop %v96
    %v98 = vmul.f32 %v95, 1.442695
    %v99 = vpow.pop %v98
    %102 = vset.pattern.permute.xlu0 0
    %103 = vperm.xlu0 %102, %v97
    %v104 = vpop.permute.xlu0 %103
    %105 = vset.pattern.permute.xlu0 0
    %106 = vperm.xlu0 %105, %v99
    %v107 = vpop.permute.xlu0 %106
    %v108 = vperm.slane %v104, %v79
    %v109 = vperm.slane %v107, %v79
    %v110 = vsel %vm82, %v109, %v108
    %v112 = vsel %vm85, %v110, 0.0
    %113 = vadd.xlane.f32.xlu0 %v112
    %v114 = vpop.xlane.xlu0 %113
    %v115 = vrcp.pop %v114
    %v118 = vmul.f32 %v21, %v104
    %v119 = vmul.f32 %v22, %v107
    %v120 = vsel %vm31, %v118, 0.0
    %v121 = vrot.slane %v120, 4
    %v122 = vadd.f32 %v120, %v121
    %v123 = vrot.slane %v122, 2
    %v124 = vadd.f32 %v122, %v123
    %v125 = vrot.slane %v124, 1
    %v126 = vadd.f32 %v124, %v125
    %v127 = vsel %vm31, %v119, 0.0
    %v128 = vrot.slane %v127, 4
    %v129 = vadd.f32 %v127, %v128
    %v130 = vrot.slane %v129, 2
    %v131 = vadd.f32 %v129, %v130
    %v132 = vrot.slane %v131, 1
    %v133 = vadd.f32 %v131, %v132
    %v135 = vrot.slane %v115, 1
    %v138 = vmul.f32 %v126, %v115
    %v139 = vmul.f32 %v133, %v135
    %v142 = vrot.slane %v139, 7
    %v143 = vsel %vm82, %v142, %v138
    %vm145 = vcmask 254976
    %146 = vst.msk [vmem:[#allocation2] sm:$0x3] %vm145, %v143
    %v147 = vperm.slane %v115, 0
    %v148 = vperm.slane %v115, 1
    %v151 = vmul.f32 %v97, %v147
    %v152 = vmul.f32 %v99, %v148
    %155 = vset.pattern.permute.xlu0 0
    %156 = vperm.xlu0 %155, %v151
    %v157 = vpop.permute.xlu0 %156
    %158 = vset.pattern.permute.xlu0 0
    %159 = vperm.xlu0 %158, %v152
    %v160 = vpop.permute.xlu0 %159
    %v161 = vperm.slane %v157, %v79
    %v162 = vperm.slane %v160, %v79
    %v163 = vsel %vm82, %v162, %v161
    %165 = vst.msk [vmem:[#allocation4] sm:$0x3] %vm85, %v163
    // Predicated region
    $region18: #{tpu_custom_call.1} parent=1 // pred_check
      _
    $region19: #{tpu_custom_call.1} parent=1 // pred_check_branch
      %167 = sbr.rel (0) target = $region21
    $region20: #{tpu_custom_call.1} parent=1 // pred_region
      %169 = vsyncadd [#allocation3], 0
      %s171 = sshll.u32 [#allocation2], 4
      %s172 = int_to_ptr.vmem [resolvable:$true] %s171
      %s173 = sshll.u32 %s4, 4
      %s174 = int_to_ptr.hbm [resolvable:$true] %s173
      %176 = dma.vmem_to_hbm [thread:$0]  %s172, 32, %s174, [#allocation3]
    $region21: #{tpu_custom_call.1} parent=1 // pred_fallthru
      _
    // Predicated region
    $region22: #{tpu_custom_call.1} parent=1 // pred_check
      _
    $region23: #{tpu_custom_call.1} parent=1 // pred_check_branch
      %178 = sbr.rel (0) target = $region25
    $region24: #{tpu_custom_call.1} parent=1 // pred_region
      %180 = vsyncadd [#allocation5], 0
      %s182 = sshll.u32 [#allocation4], 4
      %s183 = int_to_ptr.vmem [resolvable:$true] %s182
      %s184 = sshll.u32 %s5, 4
      %s185 = int_to_ptr.hbm [resolvable:$true] %s184
      %187 = dma.vmem_to_hbm [thread:$0]  %s183, 32, %s185, [#allocation5]
    $region25: #{tpu_custom_call.1} parent=1 // pred_fallthru
      _
    // Predicated region
    $region26: #{tpu_custom_call.1} parent=1 // pred_check
      _
    $region27: #{tpu_custom_call.1} parent=1 // pred_check_branch
      %189 = sbr.rel (0) target = $region29
    $region28: #{tpu_custom_call.1} parent=1 // pred_region
      %191 = dma.done [#allocation3], 32
    $region29: #{tpu_custom_call.1} parent=1 // pred_fallthru
      _
    // Predicated region
    $region30: #{tpu_custom_call.1} parent=1 // pred_check
      _
    $region31: #{tpu_custom_call.1} parent=1 // pred_check_branch
      %193 = sbr.rel (0) target = $region33
    $region32: #{tpu_custom_call.1} parent=1 // pred_region
      %195 = dma.done [#allocation5], 32
    $region33: #{tpu_custom_call.1} parent=1 // pred_fallthru
      _
    %196 = vsyncpa [#allocation3], 1
    %197 = vsyncpa [#allocation5], 1

</llo_original>
